<compile_context>
chip_gen: v6e
topology: v6e:2x2x1
jax: 0.10.0
libtpu: 0.0.40
codegen_flags: <defaults>
</compile_context>

<pallas_src>
import jax
import jax.numpy as jnp
from jax.experimental import pallas as pl
from jax.experimental.pallas import tpu as pltpu


# --------------------------------------------------------------------------- #
# Kernels
# --------------------------------------------------------------------------- #
def _folded_kernel(x_ref, w_ref, b_ref, o_ref):
    # Whole eval-mode MLP folded into one affine map: y = x @ W_eff + b_eff.
    # W_eff is passed as a [1, D] row, so this is a VPU multiply + XLU lane
    # reduce (free at the mem-bound roofline) rather than an N=1 MXU matmul.
    acc = jnp.sum(x_ref[...] * w_ref[...], axis=-1, keepdims=True)
    o_ref[...] = (acc + b_ref[0, 0]).astype(o_ref.dtype)


def _layered_kernel(x_ref, w1_ref, b1_ref, w2_ref, b2_ref, wt_ref, bt_ref, o_ref):
    cdt = w1_ref.dtype  # MXU operand dtype (bf16); accumulation stays f32.
    # Linear(D, 1024)        (Dropout(0.2) is identity in eval mode)
    h = jnp.dot(x_ref[...].astype(cdt), w1_ref[...],
                preferred_element_type=jnp.float32) + b1_ref[...]
    # Linear(1024, 128)      (Dropout(0.2) is identity in eval mode)
    h = jnp.dot(h.astype(cdt), w2_ref[...],
                preferred_element_type=jnp.float32) + b2_ref[...]
    # Tail Linear(128,64)->Dropout(0.1)->Linear(64,16)->Linear(16,1), pre-folded
    # host-side into one [1, 128] row: f32 VPU multiply + lane reduce (exact).
    o = jnp.sum(h * wt_ref[...], axis=-1, keepdims=True) + bt_ref[0, 0]
    o_ref[...] = o.astype(o_ref.dtype)
    # TODO(synk): training-mode dropout (pltpu.prng_seed / prng_random_bits
    # masks) is not implemented; eval-mode forward (identity dropout) only.


# --------------------------------------------------------------------------- #
# Host-side (one-time) parameter preparation
# --------------------------------------------------------------------------- #
def fold_affine(params, first=1, last=5):
    """Compose Linear layers first..last into one affine map (exact in eval
    mode: Dropout is identity and there is no nonlinearity)."""
    w = params[f"w{first}"].astype(jnp.float32)
    b = params[f"b{first}"].astype(jnp.float32)
    for i in range(first + 1, last + 1):
        wi = params[f"w{i}"].astype(jnp.float32)
        bi = params[f"b{i}"].astype(jnp.float32)
        w = w @ wi
        b = b @ wi + bi
    return w, b


def prepare_params(params, matmul_dtype=jnp.bfloat16):
    """Weight-load-time preprocessing.  Call ONCE and cache the result next to
    the raw params; the per-call forward never re-folds (re-folding would cost
    ~2*D*1024*128 FLOPs plus a full W1 HBM read per call)."""
    w_eff, b_eff = fold_affine(params, 1, 5)       # [D,1], [1,1] f32
    w_t, b_t = fold_affine(params, 3, 5)           # [128,1], [1,1] f32
    return {
        # folded (eval serving) path
        "w_eff_t": jnp.asarray(w_eff.T),           # [1, D] lane-major row
        "b_eff": jnp.asarray(b_eff),               # [1, 1] -> SMEM scalar
        # layered (training-stub) path
        "w1": params["w1"].astype(matmul_dtype),
        "b1": params["b1"].astype(jnp.float32),
        "w2": params["w2"].astype(matmul_dtype),
        "b2": params["b2"].astype(jnp.float32),
        "w_t_t": jnp.asarray(w_t.T),               # [1, 128] f32 (exact tail)
        "b_t": jnp.asarray(b_t),                   # [1, 1] -> SMEM scalar
    }


# --------------------------------------------------------------------------- #
# Tile sizing
# --------------------------------------------------------------------------- #
def _round8_down(n):
    return max(8, (n // 8) * 8)


def _round8_up(n):
    return max(8, -(-n // 8) * 8)


def _folded_bm(B, D):
    """Batch tile for the folded (mem-bound) path, derived from its real VMEM
    need (double-buffered [bm, D] f32 x blocks; weights are a few KiB)."""
    row_bytes = D * 4
    # ~2 MiB x blocks reach >=85% of HBM roofline; clamp rows to [256, 2048].
    bm = min(2048, max(256, (2 << 20) // row_bytes))
    # Keep 2 double-buffered x blocks (+ weights) well inside every
    # generation's scoped-VMEM default (v5e 16 MiB, v6e/v7x 32 MiB).
    while bm > 8 and bm * row_bytes > (5 << 20):
        bm //= 2
    bm = _round8_down(bm)
    if B <= bm:
        return _round8_up(B)                       # single grid step
    # Prefer >= ~8 grid steps (>= 4 per TensorCore on v7x megacore; good
    # DMA/compute overlap on single-TC v5e/v6e) without shrinking blocks below
    # ~512 KiB.
    min_bm = max(8, min(bm, ((512 << 10) // row_bytes) // 8 * 8))
    steps_bm = _round8_down(B // 8)
    return max(min_bm, min(bm, steps_bm))


def _layered_bm(B):
    # [bm, 1024] f32 intermediate -> keep the 256-row cap for this path only.
    return _round8_up(B) if B <= 256 else 256


# --------------------------------------------------------------------------- #
# Forward
# --------------------------------------------------------------------------- #
def aesthetic_predictor_forward(x, prepared, *, bm=None, layered=False):
    """Fused Pallas eval-mode forward of AestheticPredictor.

    x:        [B, input_size] float32
    prepared: output of prepare_params(params) (folded once at load time)
    """
    B, D = x.shape
    if bm is None:
        bm = _layered_bm(B) if layered else _folded_bm(B, D)
    bm = _round8_down(bm)
    # No wrapper-side jnp.pad: Pallas masks the ragged last block; rows are
    # independent so overhang garbage cannot contaminate real outputs.
    grid = (pl.cdiv(B, bm),)

    x_spec = pl.BlockSpec((bm, D), lambda i: (i, 0))
    out_spec = pl.BlockSpec((bm, 1), lambda i: (i, 0))
    out_shape = jax.ShapeDtypeStruct((B, 1), x.dtype)
    smem_spec = pl.BlockSpec(memory_space=pltpu.MemorySpace.SMEM)
    cparams = pltpu.CompilerParams(dimension_semantics=("parallel",))

    if not layered:
        return pl.pallas_call(
            _folded_kernel,
            out_shape=out_shape,
            grid_spec=pltpu.PrefetchScalarGridSpec(
                num_scalar_prefetch=0,
                grid=grid,
                in_specs=[x_spec,
                          pl.BlockSpec((1, D), lambda i: (0, 0)),  # resident row
                          smem_spec],                              # [1,1] bias
                out_specs=out_spec,
            ),
            compiler_params=cparams,
        )(x, prepared["w_eff_t"], prepared["b_eff"])

    # ---- layered (training-stub) path -------------------------------------
    def call(single_buffer):
        def const_spec(shape):
            if single_buffer:
                # Revisited every grid step -> no re-DMA; single-buffering just
                # halves resident weight VMEM (headroom to grow bm, most
                # valuable on v7x's 64 MiB physical / 32 MiB scoped budget).
                return pl.BlockSpec(shape, lambda i: (0, 0),
                                    pipeline_mode=pl.Buffered(1))
            return pl.BlockSpec(shape, lambda i: (0, 0))

        return pl.pallas_call(
            _layered_kernel,
            out_shape=out_shape,
            grid_spec=pltpu.PrefetchScalarGridSpec(
                num_scalar_prefetch=0,
                grid=grid,
                in_specs=[x_spec,
                          const_spec(prepared["w1"].shape),
                          const_spec(prepared["b1"].shape),
                          const_spec(prepared["w2"].shape),
                          const_spec(prepared["b2"].shape),
                          const_spec(prepared["w_t_t"].shape),
                          smem_spec],
                out_specs=out_spec,
            ),
            compiler_params=cparams,
        )(x, prepared["w1"], prepared["b1"], prepared["w2"], prepared["b2"],
          prepared["w_t_t"], prepared["b_t"])

    try:
        out = call(single_buffer=True)
        jax.block_until_ready(out)     # surface any Buffered(1) lowering issue
        return out
    except Exception:                  # pragma: no cover - graceful fallback
        return call(single_buffer=False)


# --------------------------------------------------------------------------- #
# Params / reference
# --------------------------------------------------------------------------- #
def init_params(key, input_size, dtype=jnp.float32):
    """nn.Linear-style init (uniform +/- 1/sqrt(fan_in)); weights stored as
    [in_features, out_features] so the kernel computes y = x @ W + b."""
    dims = [input_size, 1024, 128, 64, 16, 1]
    params = {}
    for idx in range(5):
        fan_in, fan_out = dims[idx], dims[idx + 1]
        key, kw, kb = jax.random.split(key, 3)
        bound = 1.0 / (fan_in ** 0.5)
        params[f"w{idx + 1}"] = jax.random.uniform(
            kw, (fan_in, fan_out), dtype=dtype, minval=-bound, maxval=bound)
        params[f"b{idx + 1}"] = jax.random.uniform(
            kb, (1, fan_out), dtype=dtype, minval=-bound, maxval=bound)
    return params


def reference_forward(x, params):
    h = x.astype(jnp.float32)
    for i in range(1, 6):
        h = h @ params[f"w{i}"].astype(jnp.float32) + params[f"b{i}"].astype(jnp.float32)
    return h


if __name__ == "__main__":
    key = jax.random.PRNGKey(0)
    k_params, k_x, k_x2 = jax.random.split(key, 3)

    input_size = 64
    params = init_params(k_params, input_size)
    prepared = prepare_params(params)        # fold ONCE, cached next to params

    # Main check: folded eval path.
    B = 16
    x = jax.random.normal(k_x, (B, input_size), dtype=jnp.float32)
    ref = reference_forward(x, params)
    out_folded = jax.block_until_ready(aesthetic_predictor_forward(x, prepared))
    assert out_folded.shape == (B, 1)
    assert jnp.allclose(out_folded, ref, atol=1e-4, rtol=1e-4), "folded path mismatch"

    # Ragged batch (no wrapper-side jnp.pad): Pallas masks the partial last block.
    B2 = 12
    x2 = jax.random.normal(k_x2, (B2, input_size), dtype=jnp.float32)
    ref2 = reference_forward(x2, params)
    out_ragged = jax.block_until_ready(
        aesthetic_predictor_forward(x2, prepared, bm=8))
    assert out_ragged.shape == (B2, 1)
    assert jnp.allclose(out_ragged, ref2, atol=1e-4, rtol=1e-4), "ragged batch mismatch"

    # Layered (training-stub) path: bf16 MXU operands, f32 accumulation.
    out_layered = jax.block_until_ready(
        aesthetic_predictor_forward(x, prepared, layered=True))
    assert out_layered.shape == (B, 1)
    assert jnp.allclose(out_layered, ref, atol=2e-2, rtol=2e-2), "layered path mismatch"

    print("KERNEL_OK")
</pallas_src>

<mosaic_0001>
module attributes {stable_mosaic.version = 11 : i64} {
  func.func @_folded_kernel(%arg0: i32, %arg1: memref<16x64xf32, #tpu.memory_space<vmem>>, %arg2: memref<1x64xf32, #tpu.memory_space<vmem>>, %arg3: memref<1x1xf32, #tpu.memory_space<smem>>, %arg4: memref<16x1xf32, #tpu.memory_space<vmem>>) attributes {dimension_semantics = [#tpu.dimension_semantics<parallel>], iteration_bounds = array<i64: 1>, scalar_prefetch = 0 : i64, scratch_operands = 0 : i64, tpu.core_type = #tpu.core_type<tc>, window_params = [{transform_indices = @transform_0, window_bounds = array<i64: 16, 64>}, {pipeline_mode = #tpu.pipeline_mode<synchronous>, transform_indices = @transform_1, window_bounds = array<i64: 1, 64>}, {transform_indices = @transform_2, window_bounds = array<i64: 1, 1>}, {transform_indices = @transform_3, window_bounds = array<i64: 16, 1>}]} {
    %c0 = arith.constant 0 : index
    %c0_0 = arith.constant 0 : index
    %0 = vector.load %arg1[%c0, %c0_0] : memref<16x64xf32, #tpu.memory_space<vmem>>, vector<16x64xf32>
    %c0_1 = arith.constant 0 : index
    %c0_2 = arith.constant 0 : index
    %1 = vector.load %arg2[%c0_1, %c0_2] : memref<1x64xf32, #tpu.memory_space<vmem>>, vector<1x64xf32>
    %2 = vector.broadcast %1 : vector<1x64xf32> to vector<16x64xf32>
    %3 = arith.mulf %0, %2 : vector<16x64xf32>
    %cst = arith.constant dense<0.000000e+00> : vector<16xf32>
    %4 = vector.multi_reduction <add>, %3, %cst [1] : vector<16x64xf32> to vector<16xf32>
    %5 = vector.shape_cast %4 : vector<16xf32> to vector<16x1xf32>
    %c0_3 = arith.constant 0 : index
    %c0_4 = arith.constant 0 : index
    %6 = memref.load %arg3[%c0_3, %c0_4] : memref<1x1xf32, #tpu.memory_space<smem>>
    %7 = vector.broadcast %6 : f32 to vector<16x1xf32>
    %8 = arith.addf %5, %7 : vector<16x1xf32>
    %c0_5 = arith.constant 0 : index
    %c0_6 = arith.constant 0 : index
    %9 = vector.load %arg4[%c0_5, %c0_6] : memref<16x1xf32, #tpu.memory_space<vmem>>, vector<16x1xf32>
    tpu.vector_store %arg4[%c0_5, %c0_6], %8 {strides = array<i32>} : memref<16x1xf32, #tpu.memory_space<vmem>>, vector<16x1xf32>,
    return
  }
  func.func @transform_0(%arg0: i32) -> (i32, i32) {
    %c0_i32 = arith.constant 0 : i32
    %c0_i32_0 = arith.constant 0 : i32
    return %arg0, %c0_i32 : i32, i32
  }
  func.func @transform_1(%arg0: i32) -> (i32, i32) {
    %c0_i32 = arith.constant 0 : i32
    %c0_i32_0 = arith.constant 0 : i32
    %c0_i32_1 = arith.constant 0 : i32
    return %c0_i32, %c0_i32_0 : i32, i32
  }
  func.func @transform_2(%arg0: i32) -> (i32, i32) {
    %c0_i32 = arith.constant 0 : i32
    %c0_i32_0 = arith.constant 0 : i32
    %c0_i32_1 = arith.constant 0 : i32
    return %c0_i32, %c0_i32_0 : i32, i32
  }
  func.func @transform_3(%arg0: i32) -> (i32, i32) {
    %c0_i32 = arith.constant 0 : i32
    %c0_i32_0 = arith.constant 0 : i32
    return %arg0, %c0_i32 : i32, i32
  }
}

</mosaic_0001>

<llo_original>
// kernel: tpu_custom_call.1
$region0: #{tpu_custom_call.1}
  #allocation0 [shape = 'u32[]', space=smem, size = 0x4, offset = 0x4, fixed_abs, tag = 'smem constant byte address 0x4 - core index']
  #allocation1 [shape = 'u32[144,128]{1,0:T(1,128)}', space=vmem, size = 0x12000, scoped, tag = 'internal scratch']
  #allocation2 [shape = 'f32[1,1]{1,0:T(1,128)S(6)}', space=smem, size = 0x200, scoped, tag = 'scoped memory for tpu_custom_call.1']
  %s0 = inlined_call_operand.hbm [shape: f32[16,64], index: 0, kind: input, shape index: {}]
  %s1 = inlined_call_operand.vmem [shape: f32[1,64], index: 1, kind: input, shape index: {}]
  %s2 = inlined_call_operand.<no memory space> [shape: f32[1,1], index: 2, kind: input, shape index: {}]
  %s3 = inlined_call_operand.vmem [shape: f32[16,1], index: 3, kind: output, shape index: {}]
  %s4 = sld [smem:[#allocation0]]
  $region26: #{tpu_custom_call.1} parent=0
    _
  %s6 = ssub.s32 1, %s4
  %s7 = scalar_select 0, %s6, %s4
  %8 = sst [smem:[#allocation2]] %s2
  $region1: #{tpu_custom_call.1} parent=0
    #allocation3 [shape = 'u8[8192]{0}', space=vmem, size = 0x2000, scoped, tag = 'input window, operand 0, single buffered']
    #allocation4 [shape = 's32[1]{0}', space=sflag, size = 0x4, scoped, tag = 'scoped memory for tpu_custom_call.1']
    %9 = vsyncpa [#allocation4], 0
    // Predicated region
    $region2: #{tpu_custom_call.1} parent=1 // pred_check
      _
    $region3: #{tpu_custom_call.1} parent=1 // pred_check_branch
      %11 = sbr.rel (0) target = $region5
    $region4: #{tpu_custom_call.1} parent=1 // pred_region
      %s13 = ssub.s32 256, 256
      %14 = vsyncadd [#allocation4], %s13
      %s15 = sshll.u32 [#allocation3], 4
      %s16 = int_to_ptr.vmem [resolvable:$true] %s15
      %21 = dma.hbm_to_vmem [thread:$0]  %s0, 256, %s16, [#allocation4], 128, 128, 8
    $region5: #{tpu_custom_call.1} parent=1 // pred_fallthru
      _
    // Predicated region
    $region6: #{tpu_custom_call.1} parent=1 // pred_check
      _
    $region7: #{tpu_custom_call.1} parent=1 // pred_check_branch
      %23 = sbr.rel (0) target = $region9
    $region8: #{tpu_custom_call.1} parent=1 // pred_region
      _
    $region9: #{tpu_custom_call.1} parent=1 // pred_fallthru
      _
    // Predicated region
    $region10: #{tpu_custom_call.1} parent=1 // pred_check
      _
    $region11: #{tpu_custom_call.1} parent=1 // pred_check_branch
      %25 = sbr.rel (0) target = $region13
    $region12: #{tpu_custom_call.1} parent=1 // pred_region
      _
    $region13: #{tpu_custom_call.1} parent=1 // pred_fallthru
      _
    // Predicated region
    $region14: #{tpu_custom_call.1} parent=1 // pred_check
      _
    $region15: #{tpu_custom_call.1} parent=1 // pred_check_branch
      %27 = sbr.rel (0) target = $region17
    $region16: #{tpu_custom_call.1} parent=1 // pred_region
      %28 = dma.done [#allocation4], 256
    $region17: #{tpu_custom_call.1} parent=1 // pred_fallthru
      _
    %v29 = vld [vmem:[#allocation3] sm:$0xff]
    %v30 = vld [vmem:[#allocation3 + $0x8] sm:$0xff]
    %v31 = vld [vmem:[%s1] sm:$0x1]
    %v33 = vlaneseq
    %v34 = vshrl.u32 %v33, 7
    %v35 = vsub.s32 0, %v34
    %v36 = vrot.slane %v31, %v35
    %v38 = vmul.f32 %v29, %v36
    %v39 = vmul.f32 %v30, %v36
    %vm40 = vcmask 523264
    %v41 = vsel %vm40, %v38, 0.0
    %42 = vadd.xlane.f32.xlu0 %v41
    %v43 = vpop.xlane.xlu0 %42
    %v44 = vsel %vm40, %v39, 0.0
    %45 = vadd.xlane.f32.xlu0 %v44
    %v46 = vpop.xlane.xlu0 %45
    %s47 = sld [smem:[#allocation2]]
    %v48 = vstv %s47
    %v49 = vadd.f32 %v43, %v48
    %v50 = vadd.f32 %v46, %v48
    %vm51 = vcmask 7168
    %52 = vst.msk [vmem:[%s3] sm:$0xff] %vm51, %v49
    %53 = vst.msk [vmem:[%s3 + $0x8] sm:$0xff] %vm51, %v50
    // Predicated region
    $region18: #{tpu_custom_call.1} parent=1 // pred_check
      _
    $region19: #{tpu_custom_call.1} parent=1 // pred_check_branch
      %55 = sbr.rel (0) target = $region21
    $region20: #{tpu_custom_call.1} parent=1 // pred_region
      _
    $region21: #{tpu_custom_call.1} parent=1 // pred_fallthru
      _
    // Predicated region
    $region22: #{tpu_custom_call.1} parent=1 // pred_check
      _
    $region23: #{tpu_custom_call.1} parent=1 // pred_check_branch
      %57 = sbr.rel (0) target = $region25
    $region24: #{tpu_custom_call.1} parent=1 // pred_region
      _
    $region25: #{tpu_custom_call.1} parent=1 // pred_fallthru
      _
    %58 = vsyncpa [#allocation4], 1

</llo_original>
